<compile_context>
chip_gen: v7x
topology: tpu7x:2x2x1
jax: 0.10.0
libtpu: 0.0.40
codegen_flags: <defaults>
</compile_context>

<pallas_src>
import math

import jax
import jax.numpy as jnp
from jax.experimental import pallas as pl
from jax.experimental.pallas import tpu as pltpu


def _round_up(a, b):
    return -(-a // b) * b


def _token_emb_kernel(xm_ref, xh_ref, w_ref, o_ref, buf_ref):
    """One (batch, L-tile) grid step.

    xm_ref : (tlf, F*c_in)       main window of folded activations
    xh_ref : (8,   F*c_in)       halo: next 8 folded rows (only S-1 are used)
    w_ref  : (S, F*c_in, N_out)  banded block weights (resident across grid)
    o_ref  : (tlf, N_out)        lane-dense output tile
    buf_ref: (tlf + 8, F*c_in)   VMEM staging for the overlapping window
    """
    tlf = xm_ref.shape[0]
    S = w_ref.shape[0]
    # Stage main + halo contiguously (aligned stores: tlf % 8 == 0) so the S
    # shifted LHS views are plain sublane-offset loads (cheap; kernel is
    # HBM-bound, the VPU/XLU/MXU all have slack).
    buf_ref[0:tlf, :] = xm_ref[...]
    buf_ref[tlf:tlf + 8, :] = xh_ref[...]

    acc = jnp.dot(buf_ref[0:tlf, :], w_ref[0],
                  preferred_element_type=jnp.float32)
    for s in range(1, S):                    # unrolled; S is 3 when F == 1, else 2
        acc = acc + jnp.dot(buf_ref[s:s + tlf, :], w_ref[s],
                            preferred_element_type=jnp.float32)
    o_ref[...] = acc.astype(o_ref.dtype)


def token_embedding(x, weight, *, tile_rows=2048, out_dtype=None):
    """TimesNet TokenEmbedding forward.

    x:      (B, L, c_in)
    weight: (d_model, c_in, 3)  (PyTorch Conv1d weight layout)
    Returns (B, L, d_model) ==
      Conv1d(c_in, d_model, 3, padding=1, padding_mode='replicate',
             bias=False)(x.permute(0, 2, 1)).transpose(1, 2)

    out_dtype : output storage dtype (default x.dtype).  MXU accumulation is
                always f32, so bf16 output is a pure HBM-traffic saving.
    tile_rows : target L-tile size in *folded* rows (F tokens per folded row).
    """
    B, L, c_in = x.shape
    d_model = weight.shape[0]
    if out_dtype is None:
        out_dtype = x.dtype

    # ---- lane-dense output layout -------------------------------------------
    if d_model % 128 == 0:
        F, d_eff = 1, d_model                       # already lane-dense
    elif 8 <= d_model < 128 and 128 % d_model == 0:
        F, d_eff = 128 // d_model, d_model          # fold F tokens per 128-lane row
    else:
        F, d_eff = 1, _round_up(d_model, 128)       # zero-pad N, slice at the end
    S = 3 if F == 1 else 2                          # banded-weight matmuls per tile
    Kf = F * c_in
    N_out = F * d_eff

    # ---- banded block weights ------------------------------------------------
    # With xp the replicate-padded tokens and XF[r, g*c_in:(g+1)*c_in] =
    # xp[r*F + g], the conv is:   out_fold[r] = sum_s XF[r + s] @ WB[s]
    # where WB[s][g-block, f-block] = W_tap[s*F + g - f] (zero if tap not in 0..2).
    w_taps = jnp.transpose(weight, (2, 1, 0)).astype(x.dtype)    # (3, c_in, d_model)
    if d_eff != d_model:
        w_taps = jnp.pad(w_taps, ((0, 0), (0, 0), (0, d_eff - d_model)))
    wb = jnp.zeros((S, Kf, N_out), x.dtype)
    for s in range(S):
        for g in range(F):
            for f in range(F):
                t = s * F + g - f
                if 0 <= t <= 2:
                    wb = wb.at[s, g * c_in:(g + 1) * c_in,
                               f * d_eff:(f + 1) * d_eff].set(w_taps[t])
    # TODO(synk): cache `wb` per weight instead of rebuilding it every call (tiny).

    # ---- L tiling in folded rows (VMEM-budgeted; grid >= 2 for v7x) ----------
    Lf = -(-L // F)                                  # folded rows holding real tokens
    in_b = jnp.dtype(x.dtype).itemsize
    out_b = jnp.dtype(out_dtype).itemsize
    vmem_budget = 40 * 1024 * 1024                   # fits v7x's 64 MiB scoped VMEM
    bytes_per_row = 2 * (Kf * in_b + N_out * out_b)  # double-buffered in + out
    rows_cap = max(8, (vmem_budget // bytes_per_row) // 8 * 8)
    tlf = max(8, min(_round_up(Lf, 8), _round_up(min(tile_rows, rows_cap), 8)))
    n_lt = -(-Lf // tlf)
    if B * n_lt < 2 and Lf >= 16:
        n_lt = 2                                     # keep both v7x TensorCores busy
    tlf = _round_up(-(-Lf // n_lt), 8)
    Lf_pad = n_lt * tlf
    halo_stride = tlf // 8                           # halo block-index multiplier

    # ---- padded + folded activations (the only |x|-sized wrapper copy) -------
    # Tokens: [x[0], x[0..L-1], x[L-1], 0, ...]; the extra zero rows only feed
    # output rows that are sliced away.  The fold to (.., F*c_in) is a
    # contiguous (free) reshape, so the kernel never re-reads an unfolded copy.
    tokens_needed = (Lf_pad + 8) * F
    parts = [x[:, :1, :], x, x[:, -1:, :]]
    tail = tokens_needed - (L + 2)
    if tail > 0:
        parts.append(jnp.zeros((B, tail, c_in), x.dtype))
    xf = jnp.concatenate(parts, axis=1).reshape(B, Lf_pad + 8, Kf)

    out_f = pl.pallas_call(
        _token_emb_kernel,
        out_shape=jax.ShapeDtypeStruct((B, Lf_pad, N_out), out_dtype),
        grid_spec=pltpu.PrefetchScalarGridSpec(
            num_scalar_prefetch=0,
            grid=(B, n_lt),
            in_specs=[
                # main window: folded rows [j*tlf, (j+1)*tlf)
                pl.BlockSpec((None, tlf, Kf), lambda b, j: (b, j, 0)),
                # halo window: 8 folded rows starting at (j+1)*tlf (same array)
                pl.BlockSpec((None, 8, Kf),
                             lambda b, j: (b, (j + 1) * halo_stride, 0)),
                # banded weights: whole array, resident across the grid
                pl.BlockSpec((S, Kf, N_out), lambda b, j: (0, 0, 0)),
            ],
            out_specs=pl.BlockSpec((None, tlf, N_out), lambda b, j: (b, j, 0)),
            scratch_shapes=[pltpu.VMEM((tlf + 8, Kf), x.dtype)],
        ),
        compiler_params=pltpu.CompilerParams(
            dimension_semantics=("parallel", "parallel"),
            # 48 MiB is safe on every generation (v7x scoped VMEM is 64 MiB);
            # tiles above are budgeted to ~40 MiB double-buffered.  On v5e/v6e
            # (128 MiB physical) this could be raised further for larger tiles.
            vmem_limit_bytes=48 * 1024 * 1024,
        ),
    )(xf, xf, wb)

    # ---- unfold tokens / drop padding (no copy when shapes already align) ----
    out = out_f
    if F > 1:
        out = out.reshape(B, Lf_pad * F, d_eff)
    if out.shape[1] != L or d_eff != d_model:
        out = out[:, :L, :d_model]
    return out


def _reference(x, weight):
    """Pure-JAX reference: replicate-padded conv1d, channels-last."""
    L = x.shape[1]
    xp = jnp.concatenate([x[:, :1, :], x, x[:, -1:, :]], axis=1)   # (B, L+2, c_in)
    w = jnp.transpose(weight, (2, 1, 0))                           # (3, c_in, d_model)
    return sum(
        jnp.einsum("blc,cd->bld", xp[:, t:t + L, :], w[t], precision="highest")
        for t in range(3))


if __name__ == "__main__":
    B, L, c_in, d_model = 2, 8, 4, 32

    key = jax.random.PRNGKey(0)
    kx, kw = jax.random.split(key)
    x = jax.random.normal(kx, (B, L, c_in), dtype=jnp.float32)

    # Deterministic stand-in for kaiming_normal_(mode='fan_in',
    # nonlinearity='leaky_relu'): std = gain / sqrt(fan_in), fan_in = c_in * 3.
    fan_in = c_in * 3
    std = math.sqrt(2.0 / (1.0 + 0.01 ** 2)) / math.sqrt(fan_in)
    weight = std * jax.random.normal(kw, (d_model, c_in, 3), dtype=jnp.float32)

    out = jax.block_until_ready(token_embedding(x, weight))
    assert out.shape == (B, L, d_model)
    assert jnp.allclose(out, _reference(x, weight), atol=1e-4, rtol=1e-4), \
        "mismatch vs reference"

    # Extra small sanity checks covering the other layout / tiling paths.
    def _check(b, l, c, d, tile_rows=2048):
        k1, k2 = jax.random.split(jax.random.PRNGKey(b * 131 + l + d))
        xx = jax.random.normal(k1, (b, l, c), dtype=jnp.float32)
        ww = 0.1 * jax.random.normal(k2, (d, c, 3), dtype=jnp.float32)
        got = jax.block_until_ready(token_embedding(xx, ww, tile_rows=tile_rows))
        assert got.shape == (b, l, d)
        assert jnp.allclose(got, _reference(xx, ww), atol=1e-4, rtol=1e-4), \
            ("mismatch", b, l, c, d)

    _check(1, 24, 7, 128)               # F == 1 path, 2 L-tiles, real halo rows
    _check(2, 10, 3, 48)                # d_model not a divisor/multiple of 128
    _check(1, 80, 4, 32, tile_rows=8)   # F == 4 with multiple L-tiles + real halo

    print("KERNEL_OK")
</pallas_src>

<mosaic_0001>
module attributes {stable_mosaic.version = 11 : i64} {
  func.func @_token_emb_kernel(%arg0: i32, %arg1: i32, %arg2: memref<1x8x16xf32, #tpu.memory_space<vmem>>, %arg3: memref<1x8x16xf32, #tpu.memory_space<vmem>>, %arg4: memref<2x16x128xf32, #tpu.memory_space<vmem>>, %arg5: memref<1x8x128xf32, #tpu.memory_space<vmem>>, %arg6: memref<16x16xf32, #tpu.memory_space<vmem>>) attributes {dimension_semantics = [#tpu.dimension_semantics<parallel>, #tpu.dimension_semantics<parallel>], iteration_bounds = array<i64: 2, 1>, scalar_prefetch = 0 : i64, scratch_operands = 1 : i64, tpu.core_type = #tpu.core_type<tc>, window_params = [{transform_indices = @transform_0, window_bounds = array<i64: 1, 8, 16>}, {transform_indices = @transform_1, window_bounds = array<i64: 1, 8, 16>}, {pipeline_mode = #tpu.pipeline_mode<synchronous>, transform_indices = @transform_2, window_bounds = array<i64: 2, 16, 128>}, {transform_indices = @transform_3, window_bounds = array<i64: 1, 8, 128>}]} {
    %c0 = arith.constant 0 : index
    %c0_0 = arith.constant 0 : index
    %c0_1 = arith.constant 0 : index
    %0 = vector.load %arg2[%c0, %c0_0, %c0_1] : memref<1x8x16xf32, #tpu.memory_space<vmem>>, vector<1x8x16xf32>
    %1 = vector.shape_cast %0 : vector<1x8x16xf32> to vector<8x16xf32>
    %c0_2 = arith.constant 0 : index
    %c0_3 = arith.constant 0 : index
    %2 = vector.load %arg6[%c0_2, %c0_3] : memref<16x16xf32, #tpu.memory_space<vmem>>, vector<8x16xf32>
    tpu.vector_store %arg6[%c0_2, %c0_3], %1 {strides = array<i32>} : memref<16x16xf32, #tpu.memory_space<vmem>>, vector<8x16xf32>,
    %c0_4 = arith.constant 0 : index
    %c0_5 = arith.constant 0 : index
    %c0_6 = arith.constant 0 : index
    %3 = vector.load %arg3[%c0_4, %c0_5, %c0_6] : memref<1x8x16xf32, #tpu.memory_space<vmem>>, vector<1x8x16xf32>
    %4 = vector.shape_cast %3 : vector<1x8x16xf32> to vector<8x16xf32>
    %c8 = arith.constant 8 : index
    %c0_7 = arith.constant 0 : index
    %5 = vector.load %arg6[%c8, %c0_7] : memref<16x16xf32, #tpu.memory_space<vmem>>, vector<8x16xf32>
    tpu.vector_store %arg6[%c8, %c0_7], %4 {strides = array<i32>} : memref<16x16xf32, #tpu.memory_space<vmem>>, vector<8x16xf32>,
    %c0_8 = arith.constant 0 : index
    %c0_9 = arith.constant 0 : index
    %6 = vector.load %arg6[%c0_8, %c0_9] : memref<16x16xf32, #tpu.memory_space<vmem>>, vector<8x16xf32>
    %c0_10 = arith.constant 0 : index
    %c0_11 = arith.constant 0 : index
    %c0_12 = arith.constant 0 : index
    %7 = vector.load %arg4[%c0_10, %c0_11, %c0_12] : memref<2x16x128xf32, #tpu.memory_space<vmem>>, vector<1x16x128xf32>
    %8 = vector.shape_cast %7 : vector<1x16x128xf32> to vector<16x128xf32>
    %cst = arith.constant dense<0.000000e+00> : vector<8x128xf32>
    %9 = tpu.matmul %6, %8, %cst {dimension_numbers = #tpu.dot_dimension_numbers<[1], [0], [0], [1], [0, 0, 1, 1], [], []>} : vector<8x16xf32>, vector<16x128xf32>, vector<8x128xf32> -> vector<8x128xf32>
    %c1 = arith.constant 1 : index
    %c0_13 = arith.constant 0 : index
    %10 = vector.load %arg6[%c1, %c0_13] : memref<16x16xf32, #tpu.memory_space<vmem>>, vector<8x16xf32>
    %c1_14 = arith.constant 1 : index
    %c0_15 = arith.constant 0 : index
    %c0_16 = arith.constant 0 : index
    %11 = vector.load %arg4[%c1_14, %c0_15, %c0_16] : memref<2x16x128xf32, #tpu.memory_space<vmem>>, vector<1x16x128xf32>
    %12 = vector.shape_cast %11 : vector<1x16x128xf32> to vector<16x128xf32>
    %cst_17 = arith.constant dense<0.000000e+00> : vector<8x128xf32>
    %13 = tpu.matmul %10, %12, %cst_17 {dimension_numbers = #tpu.dot_dimension_numbers<[1], [0], [0], [1], [0, 0, 1, 1], [], []>} : vector<8x16xf32>, vector<16x128xf32>, vector<8x128xf32> -> vector<8x128xf32>
    %14 = arith.addf %9, %13 : vector<8x128xf32>
    %c0_18 = arith.constant 0 : index
    %c0_19 = arith.constant 0 : index
    %c0_20 = arith.constant 0 : index
    %15 = vector.load %arg5[%c0_18, %c0_19, %c0_20] : memref<1x8x128xf32, #tpu.memory_space<vmem>>, vector<1x8x128xf32>
    %16 = vector.shape_cast %15 : vector<1x8x128xf32> to vector<8x128xf32>
    %17 = vector.shape_cast %14 : vector<8x128xf32> to vector<1x8x128xf32>
    tpu.vector_store %arg5[%c0_18, %c0_19, %c0_20], %17 {strides = array<i32>} : memref<1x8x128xf32, #tpu.memory_space<vmem>>, vector<1x8x128xf32>,
    return
  }
  func.func @transform_0(%arg0: i32, %arg1: i32) -> (i32, i32, i32) {
    %c0_i32 = arith.constant 0 : i32
    %c0_i32_0 = arith.constant 0 : i32
    return %arg0, %arg1, %c0_i32 : i32, i32, i32
  }
  func.func @transform_1(%arg0: i32, %arg1: i32) -> (i32, i32, i32) {
    %c1_i32 = arith.constant 1 : i32
    %0 = arith.addi %arg1, %c1_i32 : i32
    %c1_i32_0 = arith.constant 1 : i32
    %1 = arith.muli %0, %c1_i32_0 : i32
    %c0_i32 = arith.constant 0 : i32
    %c0_i32_1 = arith.constant 0 : i32
    return %arg0, %1, %c0_i32 : i32, i32, i32
  }
  func.func @transform_2(%arg0: i32, %arg1: i32) -> (i32, i32, i32) {
    %c0_i32 = arith.constant 0 : i32
    %c0_i32_0 = arith.constant 0 : i32
    %c0_i32_1 = arith.constant 0 : i32
    %c0_i32_2 = arith.constant 0 : i32
    return %c0_i32, %c0_i32_0, %c0_i32_1 : i32, i32, i32
  }
  func.func @transform_3(%arg0: i32, %arg1: i32) -> (i32, i32, i32) {
    %c0_i32 = arith.constant 0 : i32
    %c0_i32_0 = arith.constant 0 : i32
    return %arg0, %arg1, %c0_i32 : i32, i32, i32
  }
}

</mosaic_0001>

<llo_original>
// kernel: tpu_custom_call.1
$region0: #{tpu_custom_call.1}
  #allocation0 [shape = 'u32[]', space=smem, size = 0x4, offset = 0x4, fixed_abs, tag = 'smem constant byte address 0x4 - core index']
  #allocation1 [shape = 'u32[144,128]{1,0:T(1,128)}', space=vmem, size = 0x12000, scoped, tag = 'internal scratch']
  #allocation2 [shape = 'f32[16,16]{1,0:T(8,128)}', space=vmem, size = 0x2000, scoped, tag = 'scratch operand']
  %s0 = inlined_call_operand.hbm [shape: f32[2,16,16], index: 0, kind: input, shape index: {}]
  %s1 = inlined_call_operand.hbm [shape: f32[2,16,16], index: 1, kind: input, shape index: {}]
  %s2 = inlined_call_operand.hbm [shape: f32[2,16,128], index: 2, kind: input, shape index: {}]
  %s3 = inlined_call_operand.hbm [shape: f32[2,8,128], index: 3, kind: output, shape index: {}]
  %s4 = sld [smem:[#allocation0]]
  $region57: #{tpu_custom_call.1} parent=0
    _
  %s6 = ssub.s32 1, %s4
  %s7 = scalar_select 0, %s6, %s4
  $region1: #{tpu_custom_call.1} parent=0
    #allocation3 [shape = 'u8[8192]{0}', space=vmem, size = 0x2000, scoped, tag = 'input window, operand 0']
    #allocation4 [shape = 's32[2]{0}', space=sflag, size = 0x8, scoped, tag = 'scoped memory for tpu_custom_call.1']
    #allocation5 [shape = 's32[2]{0}', space=sflag, size = 0x8, scoped, tag = 'scoped memory for tpu_custom_call.1']
    #allocation6 [shape = 'u8[8192]{0}', space=vmem, size = 0x2000, scoped, tag = 'input window, operand 1']
    #allocation7 [shape = 's32[2]{0}', space=sflag, size = 0x8, scoped, tag = 'scoped memory for tpu_custom_call.1']
    #allocation8 [shape = 'u8[16384]{0}', space=vmem, size = 0x4000, scoped, tag = 'input window, operand 2, single buffered']
    #allocation9 [shape = 'u8[8192]{0}', space=vmem, size = 0x2000, scoped, tag = 'output window, operand 0']
    %8 = vsyncpa [#allocation4], 0
    %s9 = scalar_lea.sflag [#allocation4], 1
    %10 = vsyncpa %s9, 0
    %11 = vsyncpa [#allocation7], 0
    %s12 = scalar_lea.sflag [#allocation7], 1
    %13 = vsyncpa %s12, 0
    %14 = vsyncpa [#allocation5], 0
    %s15 = scalar_lea.sflag [#allocation5], 1
    %16 = vsyncpa %s15, 0
    loop: start=0, step=1, limit=4
    $region2: #{tpu_custom_call.1} parent=1 // loop_pre_header
      _
    $region3: #{tpu_custom_call.1} parent=1 // loop_header
      %s18 = sphi 0, %s22
      %p19 = scmp.ge.s32.totalorder %s18, 4
      %s25 = sphi 0, %s37
      %s26 = sphi 0, %s33
      %s27 = sphi 0, %s25
      %s28 = sphi 0, %s26
      %s29 = sphi 0, %s27
      %s30 = sphi 0, %s28
      %s42 = sphi 0, %s44
      %s45 = sphi 0, %s42
      %s46 = sphi 0, %s45
      %s62 = sphi 0, %s46
      %s72 = sphi 0, %s74
      %s75 = sphi 0, %s72
      %s76 = sphi 0, %s75
      %s92 = sphi 0, %s76
      %s96 = sphi 0, %s96
      %s98 = sphi 0, %s96
      %s99 = sphi 0, %s98
      %s113 = sphi 0, %s99
      %s121 = sphi 0, %s123
      %s124 = sphi 0, %s121
      %s125 = sphi 0, %s124
      %s141 = sphi 0, %s125
    $region4: #{tpu_custom_call.1} parent=1 // loop_header_branch
      %21 = sbr.rel (%p19) target = $region8
    $region5: #{tpu_custom_call.1} parent=1 // loop_body
      %s23 = ssub.s32 %s18, 1
      %s24 = ssub.s32 %s18, 2
      %s31 = sadd.s32 1, %s26
      %p32 = scmp.ge.s32.totalorder %s31, 1
      %s33 = scalar_select %p32, 0, %s31
      %s34 = sadd.s32 1, %s25
      %s35 = scalar_select %p32, %s34, %s25
      %p36 = scmp.ge.s32.totalorder %s35, 2
      %s37 = scalar_select %p36, 0, %s35
      %s38 = ssub.s32 %s25, %s37
      %s39 = ssub.s32 %s26, %s33
      %s40 = sor.u32 %s38, %s39
      %p41 = scmp.eq.s32.totalorder %s40, 0
      %s43 = sadd.s32 %s42, 1
      %s44 = scalar_select %p41, %s42, %s43
      %p47 = pneg %p41
      %p48 = scmp.eq.s32.totalorder %s18, 1
      %p49 = por %p47, %p48
      %p50 = scmp.ne.s32.totalorder %s42, %s45
      %p51 = scmp.eq.s32.totalorder %s18, 0
      %p52 = por %p50, %p51
      %p53 = scmp.ne.s32.totalorder %s42, %s45
      %p54 = scmp.eq.s32.totalorder %s23, 1
      %p55 = por %p53, %p54
      %p56 = scmp.ne.s32.totalorder %s45, %s46
      %p57 = scmp.eq.s32.totalorder %s23, 0
      %p58 = por %p56, %p57
      %p59 = scmp.ne.s32.totalorder %s45, %s46
      %p60 = scmp.eq.s32.totalorder %s24, 1
      %p61 = por %p59, %p60
      %p63 = scmp.ne.s32.totalorder %s46, %s62
      %p64 = scmp.eq.s32.totalorder %s24, 0
      %p65 = por %p63, %p64
      %s66 = sadd.s32 %s26, 1
      %s67 = sadd.s32 %s33, 1
      %s68 = ssub.s32 %s25, %s37
      %s69 = ssub.s32 %s66, %s67
      %s70 = sor.u32 %s68, %s69
      %p71 = scmp.eq.s32.totalorder %s70, 0
      %s73 = sadd.s32 %s72, 1
      %s74 = scalar_select %p71, %s72, %s73
      %p77 = pneg %p71
      %p78 = scmp.eq.s32.totalorder %s18, 1
      %p79 = por %p77, %p78
      %p80 = scmp.ne.s32.totalorder %s72, %s75
      %p81 = scmp.eq.s32.totalorder %s18, 0
      %p82 = por %p80, %p81
      %p83 = scmp.ne.s32.totalorder %s72, %s75
      %p84 = scmp.eq.s32.totalorder %s23, 1
      %p85 = por %p83, %p84
      %p86 = scmp.ne.s32.totalorder %s75, %s76
      %p87 = scmp.eq.s32.totalorder %s23, 0
      %p88 = por %p86, %p87
      %p89 = scmp.ne.s32.totalorder %s75, %s76
      %p90 = scmp.eq.s32.totalorder %s24, 1
      %p91 = por %p89, %p90
      %p93 = scmp.ne.s32.totalorder %s76, %s92
      %p94 = scmp.eq.s32.totalorder %s24, 0
      %p95 = por %p93, %p94
      %s97 = sadd.s32 %s96, 1
      %p100 = scmp.eq.s32.totalorder %s18, 1
      %p101 = scmp.ne.s32.totalorder %s96, %s98
      %p102 = scmp.eq.s32.totalorder %s18, 0
      %p103 = por %p101, %p102
      %p104 = scmp.ne.s32.totalorder %s96, %s98
      %p105 = scmp.eq.s32.totalorder %s23, 1
      %p106 = por %p104, %p105
      %p107 = scmp.ne.s32.totalorder %s98, %s99
      %p108 = scmp.eq.s32.totalorder %s23, 0
      %p109 = por %p107, %p108
      %p110 = scmp.ne.s32.totalorder %s98, %s99
      %p111 = scmp.eq.s32.totalorder %s24, 1
      %p112 = por %p110, %p111
      %p114 = scmp.ne.s32.totalorder %s99, %s113
      %p115 = scmp.eq.s32.totalorder %s24, 0
      %p116 = por %p114, %p115
      %s117 = ssub.s32 %s25, %s37
      %s118 = ssub.s32 %s26, %s33
      %s119 = sor.u32 %s117, %s118
      %p120 = scmp.eq.s32.totalorder %s119, 0
      %s122 = sadd.s32 %s121, 1
      %s123 = scalar_select %p120, %s121, %s122
      %p126 = pneg %p120
      %p127 = scmp.eq.s32.totalorder %s18, 1
      %p128 = por %p126, %p127
      %p129 = scmp.ne.s32.totalorder %s121, %s124
      %p130 = scmp.eq.s32.totalorder %s18, 0
      %p131 = por %p129, %p130
      %p132 = scmp.ne.s32.totalorder %s121, %s124
      %p133 = scmp.eq.s32.totalorder %s23, 1
      %p134 = por %p132, %p133
      %p135 = scmp.ne.s32.totalorder %s124, %s125
      %p136 = scmp.eq.s32.totalorder %s23, 0
      %p137 = por %p135, %p136
      %p138 = scmp.ne.s32.totalorder %s124, %s125
      %p139 = scmp.eq.s32.totalorder %s24, 1
      %p140 = por %p138, %p139
      %p142 = scmp.ne.s32.totalorder %s125, %s141
      %p143 = scmp.eq.s32.totalorder %s24, 0
      %p144 = por %p142, %p143
      %p145 = scmp.le.s32.totalorder 1, %s18
      %p146 = scmp.lt.s32.totalorder %s18, 3
      %p147 = pnand %p145, %p146
      %p148 = pneg %p147
      // Predicated region
      $region9: #{tpu_custom_call.1} parent=5 // pred_check
        _
      $region10: #{tpu_custom_call.1} parent=5 // pred_check_branch
        %150 = sbr.rel (%p147) target = $region12
      $region11: #{tpu_custom_call.1} parent=5 // pred_region
        %s151 = ssub.s32 %s18, 1
        // Predicated region
        $region13: #{tpu_custom_call.1} parent=11 // pred_check
          %p152 = pneg %p109
        $region14: #{tpu_custom_call.1} parent=11 // pred_check_branch
          %154 = sbr.rel (%p152) target = $region16
        $region15: #{tpu_custom_call.1} parent=11 // pred_region
          %s156 = ssub.s32 512, 512
          %157 = vsyncadd [#allocation7], %s156
          %s158 = sshll.u32 [#allocation8], 4
          %s159 = int_to_ptr.vmem [resolvable:$true] %s158
          %164 = dma.hbm_to_vmem [thread:$0]  %s2, 512, %s159, [#allocation7], 128, 128, 8
        $region16: #{tpu_custom_call.1} parent=11 // pred_fallthru
          _
      $region12: #{tpu_custom_call.1} parent=5 // pred_fallthru
        _
      %p165 = scmp.lt.s32.totalorder %s18, 2
      // Predicated region
      $region17: #{tpu_custom_call.1} parent=5 // pred_check
        %p166 = pneg %p165
      $region18: #{tpu_custom_call.1} parent=5 // pred_check_branch
        %168 = sbr.rel (%p166) target = $region20
      $region19: #{tpu_custom_call.1} parent=5 // pred_region
        // Predicated region
        $region21: #{tpu_custom_call.1} parent=19 // pred_check
          %p169 = pneg %p52
        $region22: #{tpu_custom_call.1} parent=19 // pred_check_branch
          %171 = sbr.rel (%p169) target = $region24
        $region23: #{tpu_custom_call.1} parent=19 // pred_region
          %s172 = sand.u32 %s42, 1
          %s173 = scalar_lea.sflag [#allocation4], %s172
          %s174 = sand.u32 %s42, 1
          %s175 = smul.addr %s174, 8
          %s176 = scalar_lea.vmem [#allocation3], %s175
          %s178 = ssub.s32 128, 128
          %179 = vsyncadd %s173, %s178
          %s180 = smul.addr %s25, 2
          %s181 = sadd.s32 %s26, %s180
          %s182 = smul.addr %s181, 128
          %s183 = scalar_lea.hbm %s0, %s182
          %s185 = sshll.u32 %s176, 4
          %s186 = int_to_ptr.vmem [resolvable:$true] %s185
          %188 = dma.hbm_to_vmem [thread:$0]  %s183, 128, %s186, %s173
        $region24: #{tpu_custom_call.1} parent=19 // pred_fallthru
          _
        // Predicated region
        $region25: #{tpu_custom_call.1} parent=19 // pred_check
          %p189 = pneg %p82
        $region26: #{tpu_custom_call.1} parent=19 // pred_check_branch
          %191 = sbr.rel (%p189) target = $region28
        $region27: #{tpu_custom_call.1} parent=19 // pred_region
          %s192 = sand.u32 %s18, 1
          %s193 = scalar_lea.sflag [#allocation7], %s192
          %s194 = sand.u32 %s72, 1
          %s195 = smul.addr %s194, 8
          %s196 = scalar_lea.vmem [#allocation6], %s195
          %s197 = sadd.s32 %s26, 1
          %s199 = ssub.s32 128, 128
          %200 = vsyncadd %s193, %s199
          %s201 = smul.addr %s25, 2
          %s202 = sadd.s32 %s197, %s201
          %s203 = smul.addr %s202, 128
          %s204 = scalar_lea.hbm %s1, %s203
          %s206 = sshll.u32 %s196, 4
          %s207 = int_to_ptr.vmem [resolvable:$true] %s206
          %209 = dma.hbm_to_vmem [thread:$0]  %s204, 128, %s207, %s193
        $region28: #{tpu_custom_call.1} parent=19 // pred_fallthru
          _
      $region20: #{tpu_custom_call.1} parent=5 // pred_fallthru
        _
      %p210 = scmp.le.s32.totalorder 1, %s18
      %p211 = scmp.lt.s32.totalorder %s18, 3
      %p212 = pnand %p210, %p211
      %p213 = pneg %p212
      // Predicated region
      $region29: #{tpu_custom_call.1} parent=5 // pred_check
        _
      $region30: #{tpu_custom_call.1} parent=5 // pred_check_branch
        %215 = sbr.rel (%p212) target = $region32
      $region31: #{tpu_custom_call.1} parent=5 // pred_region
        %s216 = ssub.s32 %s18, 1
        %s217 = sand.u32 %s45, 1
        %s218 = scalar_lea.sflag [#allocation4], %s217
        %s219 = sand.u32 %s45, 1
        %s220 = smul.addr %s219, 8
        %s221 = scalar_lea.vmem [#allocation3], %s220
        // Predicated region
        $region33: #{tpu_custom_call.1} parent=31 // pred_check
          %p222 = pneg %p58
        $region34: #{tpu_custom_call.1} parent=31 // pred_check_branch
          %224 = sbr.rel (%p222) target = $region36
        $region35: #{tpu_custom_call.1} parent=31 // pred_region
          %225 = dma.done %s218, 128
        $region36: #{tpu_custom_call.1} parent=31 // pred_fallthru
          _
        %s226 = sand.u32 %s23, 1
        %s227 = scalar_lea.sflag [#allocation7], %s226
        %s228 = sand.u32 %s75, 1
        %s229 = smul.addr %s228, 8
        %s230 = scalar_lea.vmem [#allocation6], %s229
        // Predicated region
        $region37: #{tpu_custom_call.1} parent=31 // pred_check
          %p231 = pneg %p88
        $region38: #{tpu_custom_call.1} parent=31 // pred_check_branch
          %233 = sbr.rel (%p231) target = $region40
        $region39: #{tpu_custom_call.1} parent=31 // pred_region
          %234 = dma.done %s227, 128
        $region40: #{tpu_custom_call.1} parent=31 // pred_fallthru
          _
        // Predicated region
        $region41: #{tpu_custom_call.1} parent=31 // pred_check
          %p235 = pneg %p109
        $region42: #{tpu_custom_call.1} parent=31 // pred_check_branch
          %237 = sbr.rel (%p235) target = $region44
        $region43: #{tpu_custom_call.1} parent=31 // pred_region
          %238 = dma.done [#allocation7], 512
        $region44: #{tpu_custom_call.1} parent=31 // pred_fallthru
          _
        %s239 = sand.u32 %s45, 1
        %s240 = scalar_lea.sflag [#allocation4], %s239
        %s241 = sand.u32 %s45, 1
        %s242 = smul.addr %s241, 8
        %s243 = scalar_lea.vmem [#allocation3], %s242
        %p244 = pneg %p58
        %p245 = pneg %p55
        %s246 = sand.u32 %s23, 1
        %s247 = scalar_lea.sflag [#allocation7], %s246
        %s248 = sand.u32 %s75, 1
        %s249 = smul.addr %s248, 8
        %s250 = scalar_lea.vmem [#allocation6], %s249
        %p251 = pneg %p88
        %p252 = pneg %p85
        %p253 = pneg %p109
        %p254 = pneg %p106
        %p255 = pneg %p137
        %p256 = pneg %p134
        %s257 = sand.u32 %s124, 1
        %s258 = scalar_lea.sflag [#allocation5], %s257
        %s259 = sand.u32 %s124, 1
        %s260 = smul.addr %s259, 8
        %s261 = scalar_lea.vmem [#allocation9], %s260
        %s262 = sadd.s32 %s28, 1
        %v263 = vld [vmem:[%s221] sm:$0xff]
        %vm264 = vcmask 130048
        %265 = vst.msk [vmem:[#allocation2] sm:$0xff] %vm264, %v263
        %v266 = vld [vmem:[%s230] sm:$0xff]
        %267 = vst.msk [vmem:[#allocation2 + $0x8] sm:$0xff] %vm264, %v266
        %v268 = vld [vmem:[#allocation2] sm:$0xff]
        %v269 = vld [vmem:[#allocation8] sm:$0xff]
        %v270 = vld [vmem:[#allocation8 + $0x8] sm:$0xff]
        %v271 = vld [vmem:[#allocation2 + $0x1] sm:$0xff]
        %s272 = scalar_lea.vmem [#allocation8], 16
        %v273 = vld [vmem:[%s272] sm:$0xff]
        %v274 = vld [vmem:[%s272 + $0x8] sm:$0xff]
        %v276 = vsel %vm264, %v271, 0
        %278 = vmatprep.subr.mxu0 0.0
        %279 = vmatpush1.msra.mxu0 %v273
        %280 = vmatprep.subr.mxu0 0.0
        %281 = vmatpush1.msra.mxu0 %v274
        %282 = vmatprep.subr.mxu0 0.0
        %283 = vmatpush1.msra.mxu0 0.0
        %284 = vmatprep.subr.mxu0 0.0
        %285 = vmatpush1.msra.mxu0 0.0
        %286 = vmatprep.subr.mxu0 0.0
        %287 = vmatpush1.msra.mxu0 0.0
        %288 = vmatprep.subr.mxu0 0.0
        %289 = vmatpush1.msra.mxu0 0.0
        %290 = vmatprep.subr.mxu0 0.0
        %291 = vmatpush1.msra.mxu0 0.0
        %292 = vmatprep.subr.mxu0 0.0
        %293 = vmatpush1.msra.mxu0 0.0
        %294 = vmatprep.subr.mxu0 0.0
        %295 = vmatpush1.msra.mxu0 0.0
        %296 = vmatprep.subr.mxu0 0.0
        %297 = vmatpush1.msra.mxu0 0.0
        %298 = vmatprep.subr.mxu0 0.0
        %299 = vmatpush1.msra.mxu0 0.0
        %300 = vmatprep.subr.mxu0 0.0
        %301 = vmatpush1.msra.mxu0 0.0
        %302 = vmatprep.subr.mxu0 0.0
        %303 = vmatpush1.msra.mxu0 0.0
        %304 = vmatprep.subr.mxu0 0.0
        %305 = vmatpush1.msra.mxu0 0.0
        %306 = vmatprep.subr.mxu0 0.0
        %307 = vmatpush1.msra.mxu0 0.0
        %308 = vmatprep.subr.mxu0 0.0
        %309 = vmatpush1.msra.mxu0 0.0
        %310 = vmatprep.subr.mxu0 0.0
        %311 = vmatpush1.msra.mxu0 0.0
        %312 = vmatprep.subr.mxu0 0.0
        %313 = vmatpush1.msra.mxu0 0.0
        %314 = vmatprep.subr.mxu0 0.0
        %315 = vmatpush1.msra.mxu0 0.0
        %316 = vmatprep.subr.mxu0 0.0
        %317 = vmatpush1.msra.mxu0 0.0
        %318 = vmatprep.subr.mxu0 0.0
        %319 = vmatpush1.msra.mxu0 0.0
        %320 = vmatprep.subr.mxu0 0.0
        %321 = vmatpush1.msra.mxu0 0.0
        %322 = vmatprep.subr.mxu0 0.0
        %323 = vmatpush1.msra.mxu0 0.0
        %324 = vmatprep.subr.mxu0 0.0
        %325 = vmatpush1.msra.mxu0 0.0
        %326 = vmatprep.subr.mxu0 0.0
        %327 = vmatpush1.msra.mxu0 0.0
        %328 = vmatprep.subr.mxu0 0.0
        %329 = vmatpush1.msra.mxu0 0.0
        %330 = vmatprep.subr.mxu0 0.0
        %331 = vmatpush1.msra.mxu0 0.0
        %332 = vmatprep.subr.mxu0 0.0
        %333 = vmatpush1.msra.mxu0 0.0
        %334 = vmatprep.subr.mxu0 0.0
        %335 = vmatpush1.msra.mxu0 0.0
        %336 = vmatprep.subr.mxu0 0.0
        %337 = vmatpush1.msra.mxu0 0.0
        %338 = vmatprep.subr.mxu0 0.0
        %339 = vmatpush1.msra.mxu0 0.0
        %340 = vmatprep.subr.mxu0 0.0
        %341 = vmatpush1.msra.mxu0 0.0
        %342 = vmatprep.mubr.f32.mxu0 0.0
        %343 = vmatmul.mubr.f32.gmra.mrb[0].mxu0 %v276
        %v344 = vpop.f32.mrb[0].mxu0
        %v345 = vadd.f32 0.0, %v344
        %v346 = vpop.f32.mrb[0].mxu0
        %347 = vdwg.mxu0
        %v349 = vsel %vm264, %v268, 0
        %351 = vmatprep.subr.mxu0 0.0
        %352 = vmatpush1.msra.mxu0 %v269
        %353 = vmatprep.subr.mxu0 0.0
        %354 = vmatpush1.msra.mxu0 %v270
        %355 = vmatprep.subr.mxu0 0.0
        %356 = vmatpush1.msra.mxu0 0.0
        %357 = vmatprep.subr.mxu0 0.0
        %358 = vmatpush1.msra.mxu0 0.0
        %359 = vmatprep.subr.mxu0 0.0
        %360 = vmatpush1.msra.mxu0 0.0
        %361 = vmatprep.subr.mxu0 0.0
        %362 = vmatpush1.msra.mxu0 0.0
        %363 = vmatprep.subr.mxu0 0.0
        %364 = vmatpush1.msra.mxu0 0.0
        %365 = vmatprep.subr.mxu0 0.0
        %366 = vmatpush1.msra.mxu0 0.0
        %367 = vmatprep.subr.mxu0 0.0
        %368 = vmatpush1.msra.mxu0 0.0
        %369 = vmatprep.subr.mxu0 0.0
        %370 = vmatpush1.msra.mxu0 0.0
        %371 = vmatprep.subr.mxu0 0.0
        %372 = vmatpush1.msra.mxu0 0.0
        %373 = vmatprep.subr.mxu0 0.0
        %374 = vmatpush1.msra.mxu0 0.0
        %375 = vmatprep.subr.mxu0 0.0
        %376 = vmatpush1.msra.mxu0 0.0
        %377 = vmatprep.subr.mxu0 0.0
        %378 = vmatpush1.msra.mxu0 0.0
        %379 = vmatprep.subr.mxu0 0.0
        %380 = vmatpush1.msra.mxu0 0.0
        %381 = vmatprep.subr.mxu0 0.0
        %382 = vmatpush1.msra.mxu0 0.0
        %383 = vmatprep.subr.mxu0 0.0
        %384 = vmatpush1.msra.mxu0 0.0
        %385 = vmatprep.subr.mxu0 0.0
        %386 = vmatpush1.msra.mxu0 0.0
        %387 = vmatprep.subr.mxu0 0.0
        %388 = vmatpush1.msra.mxu0 0.0
        %389 = vmatprep.subr.mxu0 0.0
        %390 = vmatpush1.msra.mxu0 0.0
        %391 = vmatprep.subr.mxu0 0.0
        %392 = vmatpush1.msra.mxu0 0.0
        %393 = vmatprep.subr.mxu0 0.0
        %394 = vmatpush1.msra.mxu0 0.0
        %395 = vmatprep.subr.mxu0 0.0
        %396 = vmatpush1.msra.mxu0 0.0
        %397 = vmatprep.subr.mxu0 0.0
        %398 = vmatpush1.msra.mxu0 0.0
        %399 = vmatprep.subr.mxu0 0.0
        %400 = vmatpush1.msra.mxu0 0.0
        %401 = vmatprep.subr.mxu0 0.0
        %402 = vmatpush1.msra.mxu0 0.0
        %403 = vmatprep.subr.mxu0 0.0
        %404 = vmatpush1.msra.mxu0 0.0
        %405 = vmatprep.subr.mxu0 0.0
        %406 = vmatpush1.msra.mxu0 0.0
        %407 = vmatprep.subr.mxu0 0.0
        %408 = vmatpush1.msra.mxu0 0.0
        %409 = vmatprep.subr.mxu0 0.0
        %410 = vmatpush1.msra.mxu0 0.0
        %411 = vmatprep.subr.mxu0 0.0
        %412 = vmatpush1.msra.mxu0 0.0
        %413 = vmatprep.subr.mxu0 0.0
        %414 = vmatpush1.msra.mxu0 0.0
        %415 = vmatprep.mubr.f32.mxu0 0.0
        %416 = vmatmul.mubr.f32.gmra.mrb[0].mxu0 %v349
        %v417 = vpop.f32.mrb[0].mxu0
        %v418 = vadd.f32 %v345, %v417
        %v419 = vpop.f32.mrb[0].mxu0
        %420 = vdwg.mxu0
        %421 = vst [vmem:[%s261] sm:$0xff] %v418
        %s422 = sand.u32 %s124, 1
        %s423 = scalar_lea.sflag [#allocation5], %s422
        %s424 = sand.u32 %s124, 1
        %s425 = smul.addr %s424, 8
        %s426 = scalar_lea.vmem [#allocation9], %s425
        // Predicated region
        $region45: #{tpu_custom_call.1} parent=31 // pred_check
          %p427 = pneg %p134
        $region46: #{tpu_custom_call.1} parent=31 // pred_check_branch
          %429 = sbr.rel (%p427) target = $region48
        $region47: #{tpu_custom_call.1} parent=31 // pred_region
          %s431 = ssub.s32 128, 128
          %432 = vsyncadd %s423, %s431
          %s433 = sadd.s32 %s28, %s27
          %s434 = smul.addr %s433, 128
          %s435 = scalar_lea.hbm %s3, %s434
          %s437 = sshll.u32 %s426, 4
          %s438 = int_to_ptr.vmem [resolvable:$true] %s437
          %440 = dma.vmem_to_hbm [thread:$0]  %s438, 128, %s435, %s423
        $region48: #{tpu_custom_call.1} parent=31 // pred_fallthru
          _
      $region32: #{tpu_custom_call.1} parent=5 // pred_fallthru
        _
      %p441 = scmp.le.s32.totalorder 2, %s18
      // Predicated region
      $region49: #{tpu_custom_call.1} parent=5 // pred_check
        %p442 = pneg %p441
      $region50: #{tpu_custom_call.1} parent=5 // pred_check_branch
        %444 = sbr.rel (%p442) target = $region52
      $region51: #{tpu_custom_call.1} parent=5 // pred_region
        %s445 = ssub.s32 %s18, 2
        // Predicated region
        $region53: #{tpu_custom_call.1} parent=51 // pred_check
          %p446 = pneg %p140
        $region54: #{tpu_custom_call.1} parent=51 // pred_check_branch
          %448 = sbr.rel (%p446) target = $region56
        $region55: #{tpu_custom_call.1} parent=51 // pred_region
          %s449 = sand.u32 %s125, 1
          %s450 = scalar_lea.sflag [#allocation5], %s449
          %s451 = sand.u32 %s125, 1
          %s452 = smul.addr %s451, 8
          %s453 = scalar_lea.vmem [#allocation9], %s452
          %454 = dma.done %s450, 128
        $region56: #{tpu_custom_call.1} parent=51 // pred_fallthru
          _
      $region52: #{tpu_custom_call.1} parent=5 // pred_fallthru
        _
    $region6: #{tpu_custom_call.1} parent=1 // loop_footer
      %s22 = sadd.s32 1, %s18
    $region7: #{tpu_custom_call.1} parent=1 // loop_footer_branch
      %17 = sbr.rel target = $region3
    $region8: #{tpu_custom_call.1} parent=1 // loop_exit
      _
    %455 = vsyncpa [#allocation4], 1
    %s456 = scalar_lea.sflag [#allocation4], 1
    %457 = vsyncpa %s456, 1
    %458 = vsyncpa [#allocation7], 1
    %s459 = scalar_lea.sflag [#allocation7], 1
    %460 = vsyncpa %s459, 1
    %461 = vsyncpa [#allocation5], 1
    %s462 = scalar_lea.sflag [#allocation5], 1
    %463 = vsyncpa %s462, 1

</llo_original>
